<compile_context>
chip_gen: v7x
topology: tpu7x:2x2x1
jax: 0.10.0
libtpu: 0.0.40
codegen_flags: <defaults>
</compile_context>

<pallas_src>
import functools

import numpy as np
import jax
import jax.numpy as jnp
from jax.experimental import pallas as pl
from jax.experimental.pallas import tpu as pltpu

_TWO_PI = float(2.0 * np.pi)
_HALF_PI = float(0.5 * np.pi)


def _rff_kernel(x_ref, w_ref, phase_ref, o_ref, *, pack):
    # x_ref:     (tb, P)  f32 — P batch elements packed per output row.
    # w_ref:     (P, C)   f32 — row p holds 2*pi*[w, w] in lanes [p*E,(p+1)*E), 0 elsewhere.
    # phase_ref: (1, C)   f32 — [0]*H ++ [pi/2]*H tiled P times (cos = shifted sin).
    # o_ref:     (tb, C)  f32 — C = P * 2H (128 lanes when packed).
    proj = x_ref[:, 0:1] * w_ref[0:1, :]                 # (tb, C) VPU broadcast outer product
    for p in range(1, pack):                             # static unroll over the pack factor
        proj = proj + x_ref[:, p:p + 1] * w_ref[p:p + 1, :]
    # Single transcendental pass + single full-width (lane-dense) store.
    o_ref[...] = jnp.sin(proj + phase_ref[...])


def gaussian_random_fourier_features(x, rff_weights, *, max_rows_per_tile=8192):
    """x: (B,) float time steps; rff_weights: (H,) float. Returns (B, 2*H) f32."""
    B = x.shape[0]
    H = rff_weights.shape[0]
    E = 2 * H

    # Pack P batch elements per 128-lane output row when 2H divides 128.
    P = 128 // E if (E <= 128 and 128 % E == 0) else 1
    C = P * E

    w = rff_weights.astype(jnp.float32)
    w2 = jnp.concatenate([w, w]) * _TWO_PI                                # (E,)
    phase = jnp.concatenate([jnp.zeros((H,), jnp.float32),
                             jnp.full((H,), _HALF_PI, jnp.float32)])      # (E,)
    w_bd = jnp.kron(jnp.eye(P, dtype=jnp.float32), w2[None, :])           # (P, C) block-diagonal
    phase_row = jnp.tile(phase, P)[None, :]                               # (1, C)

    # Rows per grid step: capped by a conservative VMEM budget (double-buffered
    # in+out blocks ~= 8 * tb * (C + P) bytes) and by max_rows_per_tile.
    vmem_budget_bytes = 16 * 1024 * 1024
    tb_cap = max(8, vmem_budget_bytes // (8 * (C + P)))
    tb_cap = min(tb_cap, max_rows_per_tile)
    tb_cap -= tb_cap % 8

    rows = pl.cdiv(B, P)
    if rows <= tb_cap:
        tb_rows = rows                       # single full-extent block (bypasses (8,128) rule)
        rows_padded = rows
    else:
        tb_rows = tb_cap                     # multiple of 8 sublanes
        rows_padded = pl.cdiv(rows, tb_rows) * tb_rows
    grid = (rows_padded // tb_rows,)

    # Pad the batch up to whole packed rows / whole tiles; slice the result back.
    x_flat = x.astype(jnp.float32).reshape(B)
    pad = rows_padded * P - B
    if pad:
        x_flat = jnp.concatenate([x_flat, jnp.zeros((pad,), jnp.float32)])
    x2d = x_flat.reshape(rows_padded, P)

    out = pl.pallas_call(
        functools.partial(_rff_kernel, pack=P),
        out_shape=jax.ShapeDtypeStruct((rows_padded, C), jnp.float32),
        grid_spec=pltpu.PrefetchScalarGridSpec(
            num_scalar_prefetch=0,
            grid=grid,
            in_specs=[
                pl.BlockSpec((tb_rows, P), lambda i: (i, 0)),   # stream packed batch tiles
                pl.BlockSpec((P, C), lambda i: (0, 0)),         # weights resident in VMEM
                pl.BlockSpec((1, C), lambda i: (0, 0)),         # phase row resident in VMEM
            ],
            out_specs=pl.BlockSpec((tb_rows, C), lambda i: (i, 0)),
        ),
        compiler_params=pltpu.CompilerParams(
            dimension_semantics=("parallel",),  # harmless at grid=1; shards tiles on 2-TC chips
        ),
    )(x2d, w_bd, phase_row)

    # Contiguous unpack: (rows, P*E) -> (rows*P, E), then drop the padding rows.
    return out.reshape(rows_padded * P, E)[:B]


def reference(x, rff_weights):
    # Same association as the PyTorch module: (x * w) * 2 * pi, [sin | cos].
    proj = x[:, None] * rff_weights[None, :] * 2.0 * np.pi
    return jnp.concatenate([jnp.sin(proj), jnp.cos(proj)], axis=-1)


if __name__ == "__main__":
    embed_dim = 32
    scale = 30.0
    batch = 8

    key = jax.random.PRNGKey(0)
    k_w, k_x = jax.random.split(key)

    # Deterministic parameter init: randn(embed_dim // 2) * scale (frozen buffer).
    rff_weights = jax.random.normal(k_w, (embed_dim // 2,), dtype=jnp.float32) * scale
    # Time steps in [0, 1).
    x = jax.random.uniform(k_x, (batch,), dtype=jnp.float32)

    out = gaussian_random_fourier_features(x, rff_weights)
    out = jax.block_until_ready(out)

    ref = reference(x, rff_weights)
    assert out.shape == (batch, embed_dim), out.shape
    # Tolerance covers the (2*pi*w)*x reassociation and the cos(t)=sin(t+pi/2)
    # phase trick (~arg*2^-24 ~= 3.6e-5 rad at the ~±600-rad arguments produced
    # by scale=30) plus f32 sin/cos range reduction. Do not tighten.
    np.testing.assert_allclose(np.asarray(out), np.asarray(ref), rtol=5e-4, atol=5e-4)

    print("KERNEL_OK")
</pallas_src>

<mosaic_0001>
module attributes {stable_mosaic.version = 11 : i64} {
  func.func @_rff_kernel(%arg0: i32, %arg1: memref<2x4xf32, #tpu.memory_space<vmem>>, %arg2: memref<4x128xf32, #tpu.memory_space<vmem>>, %arg3: memref<1x128xf32, #tpu.memory_space<vmem>>, %arg4: memref<2x128xf32, #tpu.memory_space<vmem>>) attributes {dimension_semantics = [#tpu.dimension_semantics<parallel>], iteration_bounds = array<i64: 1>, scalar_prefetch = 0 : i64, scratch_operands = 0 : i64, tpu.core_type = #tpu.core_type<tc>, window_params = [{transform_indices = @transform_0, window_bounds = array<i64: 2, 4>}, {pipeline_mode = #tpu.pipeline_mode<synchronous>, transform_indices = @transform_1, window_bounds = array<i64: 4, 128>}, {pipeline_mode = #tpu.pipeline_mode<synchronous>, transform_indices = @transform_2, window_bounds = array<i64: 1, 128>}, {transform_indices = @transform_3, window_bounds = array<i64: 2, 128>}]} {
    %c0 = arith.constant 0 : index
    %c0_0 = arith.constant 0 : index
    %0 = vector.load %arg1[%c0, %c0_0] : memref<2x4xf32, #tpu.memory_space<vmem>>, vector<2x1xf32>
    %c0_1 = arith.constant 0 : index
    %c0_2 = arith.constant 0 : index
    %1 = vector.load %arg2[%c0_1, %c0_2] : memref<4x128xf32, #tpu.memory_space<vmem>>, vector<1x128xf32>
    %2 = vector.broadcast %0 : vector<2x1xf32> to vector<2x128xf32>
    %3 = vector.broadcast %1 : vector<1x128xf32> to vector<2x128xf32>
    %4 = arith.mulf %2, %3 : vector<2x128xf32>
    %c0_3 = arith.constant 0 : index
    %c1 = arith.constant 1 : index
    %5 = vector.load %arg1[%c0_3, %c1] : memref<2x4xf32, #tpu.memory_space<vmem>>, vector<2x1xf32>
    %c1_4 = arith.constant 1 : index
    %c0_5 = arith.constant 0 : index
    %6 = vector.load %arg2[%c1_4, %c0_5] : memref<4x128xf32, #tpu.memory_space<vmem>>, vector<1x128xf32>
    %7 = vector.broadcast %5 : vector<2x1xf32> to vector<2x128xf32>
    %8 = vector.broadcast %6 : vector<1x128xf32> to vector<2x128xf32>
    %9 = arith.mulf %7, %8 : vector<2x128xf32>
    %10 = arith.addf %4, %9 : vector<2x128xf32>
    %c0_6 = arith.constant 0 : index
    %c2 = arith.constant 2 : index
    %11 = vector.load %arg1[%c0_6, %c2] : memref<2x4xf32, #tpu.memory_space<vmem>>, vector<2x1xf32>
    %c2_7 = arith.constant 2 : index
    %c0_8 = arith.constant 0 : index
    %12 = vector.load %arg2[%c2_7, %c0_8] : memref<4x128xf32, #tpu.memory_space<vmem>>, vector<1x128xf32>
    %13 = vector.broadcast %11 : vector<2x1xf32> to vector<2x128xf32>
    %14 = vector.broadcast %12 : vector<1x128xf32> to vector<2x128xf32>
    %15 = arith.mulf %13, %14 : vector<2x128xf32>
    %16 = arith.addf %10, %15 : vector<2x128xf32>
    %c0_9 = arith.constant 0 : index
    %c3 = arith.constant 3 : index
    %17 = vector.load %arg1[%c0_9, %c3] : memref<2x4xf32, #tpu.memory_space<vmem>>, vector<2x1xf32>
    %c3_10 = arith.constant 3 : index
    %c0_11 = arith.constant 0 : index
    %18 = vector.load %arg2[%c3_10, %c0_11] : memref<4x128xf32, #tpu.memory_space<vmem>>, vector<1x128xf32>
    %19 = vector.broadcast %17 : vector<2x1xf32> to vector<2x128xf32>
    %20 = vector.broadcast %18 : vector<1x128xf32> to vector<2x128xf32>
    %21 = arith.mulf %19, %20 : vector<2x128xf32>
    %22 = arith.addf %16, %21 : vector<2x128xf32>
    %c0_12 = arith.constant 0 : index
    %c0_13 = arith.constant 0 : index
    %23 = vector.load %arg3[%c0_12, %c0_13] : memref<1x128xf32, #tpu.memory_space<vmem>>, vector<1x128xf32>
    %24 = vector.broadcast %23 : vector<1x128xf32> to vector<2x128xf32>
    %25 = arith.addf %22, %24 : vector<2x128xf32>
    %26 = math.sin %25 : vector<2x128xf32>
    %c0_14 = arith.constant 0 : index
    %c0_15 = arith.constant 0 : index
    %27 = vector.load %arg4[%c0_14, %c0_15] : memref<2x128xf32, #tpu.memory_space<vmem>>, vector<2x128xf32>
    tpu.vector_store %arg4[%c0_14, %c0_15], %26 {strides = array<i32>} : memref<2x128xf32, #tpu.memory_space<vmem>>, vector<2x128xf32>,
    return
  }
  func.func @transform_0(%arg0: i32) -> (i32, i32) {
    %c0_i32 = arith.constant 0 : i32
    %c0_i32_0 = arith.constant 0 : i32
    return %arg0, %c0_i32 : i32, i32
  }
  func.func @transform_1(%arg0: i32) -> (i32, i32) {
    %c0_i32 = arith.constant 0 : i32
    %c0_i32_0 = arith.constant 0 : i32
    %c0_i32_1 = arith.constant 0 : i32
    return %c0_i32, %c0_i32_0 : i32, i32
  }
  func.func @transform_2(%arg0: i32) -> (i32, i32) {
    %c0_i32 = arith.constant 0 : i32
    %c0_i32_0 = arith.constant 0 : i32
    %c0_i32_1 = arith.constant 0 : i32
    return %c0_i32, %c0_i32_0 : i32, i32
  }
  func.func @transform_3(%arg0: i32) -> (i32, i32) {
    %c0_i32 = arith.constant 0 : i32
    %c0_i32_0 = arith.constant 0 : i32
    return %arg0, %c0_i32 : i32, i32
  }
}

</mosaic_0001>

<llo_original>
// kernel: tpu_custom_call.1
$region0: #{tpu_custom_call.1}
  #allocation0 [shape = 'u32[]', space=smem, size = 0x4, offset = 0x4, fixed_abs, tag = 'smem constant byte address 0x4 - core index']
  #allocation1 [shape = 'u32[144,128]{1,0:T(1,128)}', space=vmem, size = 0x12000, scoped, tag = 'internal scratch']
  %s0 = inlined_call_operand.hbm [shape: f32[2,4], index: 0, kind: input, shape index: {}]
  %s1 = inlined_call_operand.hbm [shape: f32[4,128], index: 1, kind: input, shape index: {}]
  %s2 = inlined_call_operand.vmem [shape: f32[1,128], index: 2, kind: input, shape index: {}]
  %s3 = inlined_call_operand.hbm [shape: f32[2,128], index: 3, kind: output, shape index: {}]
  %s4 = sld [smem:[#allocation0]]
  $region30: #{tpu_custom_call.1} parent=0
    _
  %s6 = ssub.s32 1, %s4
  %s7 = scalar_select 0, %s6, %s4
  $region1: #{tpu_custom_call.1} parent=0
    #allocation2 [shape = 'u8[1024]{0}', space=vmem, size = 0x400, scoped, tag = 'input window, operand 0, single buffered']
    #allocation3 [shape = 's32[1]{0}', space=sflag, size = 0x4, scoped, tag = 'scoped memory for tpu_custom_call.1']
    #allocation4 [shape = 's32[1]{0}', space=sflag, size = 0x4, scoped, tag = 'scoped memory for tpu_custom_call.1']
    #allocation5 [shape = 'u8[2048]{0}', space=vmem, size = 0x800, scoped, tag = 'input window, operand 1, single buffered']
    #allocation6 [shape = 's32[1]{0}', space=sflag, size = 0x4, scoped, tag = 'scoped memory for tpu_custom_call.1']
    #allocation7 [shape = 'u8[1024]{0}', space=vmem, size = 0x400, scoped, tag = 'output window, operand 0, single buffered']
    %8 = vsyncpa [#allocation3], 0
    %9 = vsyncpa [#allocation6], 0
    %10 = vsyncpa [#allocation4], 0
    // Predicated region
    $region2: #{tpu_custom_call.1} parent=1 // pred_check
      _
    $region3: #{tpu_custom_call.1} parent=1 // pred_check_branch
      %12 = sbr.rel (0) target = $region5
    $region4: #{tpu_custom_call.1} parent=1 // pred_region
      %s14 = ssub.s32 32, 32
      %15 = vsyncadd [#allocation3], %s14
      %s17 = sshll.u32 [#allocation2], 4
      %s18 = int_to_ptr.vmem [resolvable:$true] %s17
      %20 = dma.hbm_to_vmem [thread:$0]  %s0, 32, %s18, [#allocation3]
    $region5: #{tpu_custom_call.1} parent=1 // pred_fallthru
      _
    // Predicated region
    $region6: #{tpu_custom_call.1} parent=1 // pred_check
      _
    $region7: #{tpu_custom_call.1} parent=1 // pred_check_branch
      %22 = sbr.rel (0) target = $region9
    $region8: #{tpu_custom_call.1} parent=1 // pred_region
      %s24 = ssub.s32 64, 64
      %25 = vsyncadd [#allocation6], %s24
      %s27 = sshll.u32 [#allocation5], 4
      %s28 = int_to_ptr.vmem [resolvable:$true] %s27
      %30 = dma.hbm_to_vmem [thread:$0]  %s1, 64, %s28, [#allocation6]
    $region9: #{tpu_custom_call.1} parent=1 // pred_fallthru
      _
    // Predicated region
    $region10: #{tpu_custom_call.1} parent=1 // pred_check
      _
    $region11: #{tpu_custom_call.1} parent=1 // pred_check_branch
      %32 = sbr.rel (0) target = $region13
    $region12: #{tpu_custom_call.1} parent=1 // pred_region
      _
    $region13: #{tpu_custom_call.1} parent=1 // pred_fallthru
      _
    // Predicated region
    $region14: #{tpu_custom_call.1} parent=1 // pred_check
      _
    $region15: #{tpu_custom_call.1} parent=1 // pred_check_branch
      %34 = sbr.rel (0) target = $region17
    $region16: #{tpu_custom_call.1} parent=1 // pred_region
      %35 = dma.done [#allocation3], 32
    $region17: #{tpu_custom_call.1} parent=1 // pred_fallthru
      _
    // Predicated region
    $region18: #{tpu_custom_call.1} parent=1 // pred_check
      _
    $region19: #{tpu_custom_call.1} parent=1 // pred_check_branch
      %37 = sbr.rel (0) target = $region21
    $region20: #{tpu_custom_call.1} parent=1 // pred_region
      %38 = dma.done [#allocation6], 64
    $region21: #{tpu_custom_call.1} parent=1 // pred_fallthru
      _
    %v39 = vld [vmem:[#allocation2] sm:$0x3]
    %v40 = vld [vmem:[#allocation5] sm:$0x1]
    %42 = vset.pattern.permute.xlu0 0
    %43 = vperm.xlu0 %42, %v39
    %v44 = vpop.permute.xlu0 %43
    %v46 = vlaneseq
    %v47 = vshrl.u32 %v46, 7
    %v48 = vsub.s32 0, %v47
    %v49 = vrot.slane %v40, %v48
    %v50 = vmul.f32 %v44, %v49
    %v51 = vld [vmem:[#allocation5 + $0x1] sm:$0x1]
    %52 = vset.pattern.permute.xlu0 1
    %53 = vperm.xlu0 %52, %v39
    %v54 = vpop.permute.xlu0 %53
    %v56 = vlaneseq
    %v57 = vshrl.u32 %v56, 7
    %v58 = vsub.s32 0, %v57
    %v59 = vrot.slane %v51, %v58
    %v60 = vmul.f32 %v54, %v59
    %v61 = vadd.f32 %v50, %v60
    %v62 = vld [vmem:[#allocation5 + $0x2] sm:$0x1]
    %63 = vset.pattern.permute.xlu0 2
    %64 = vperm.xlu0 %63, %v39
    %v65 = vpop.permute.xlu0 %64
    %v67 = vlaneseq
    %v68 = vshrl.u32 %v67, 7
    %v69 = vsub.s32 0, %v68
    %v70 = vrot.slane %v62, %v69
    %v71 = vmul.f32 %v65, %v70
    %v72 = vadd.f32 %v61, %v71
    %v73 = vld [vmem:[#allocation5 + $0x3] sm:$0x1]
    %74 = vset.pattern.permute.xlu0 3
    %75 = vperm.xlu0 %74, %v39
    %v76 = vpop.permute.xlu0 %75
    %v78 = vlaneseq
    %v79 = vshrl.u32 %v78, 7
    %v80 = vsub.s32 0, %v79
    %v81 = vrot.slane %v73, %v80
    %v82 = vmul.f32 %v76, %v81
    %v83 = vadd.f32 %v72, %v82
    %v84 = vld [vmem:[%s2] sm:$0x1]
    %v86 = vlaneseq
    %v87 = vshrl.u32 %v86, 7
    %v88 = vsub.s32 0, %v87
    %v89 = vrot.slane %v84, %v88
    %v91 = vadd.f32 %v83, %v89
    %v92 = vand.u32 2147483647, %v91
    %vm93 = vcmp.le.f32.partialorder %v92, 0.7853982
    %vm94 = vcmp.lt.s32.totalorder %v91, 0
    %v95 = vand.u32 %v91, 2139095040
    %v96 = vshrl.u32 %v95, 23
    %v97 = vsub.s32 %v96, 127
    %v98 = vand.u32 2147483647, %v91
    %v99 = vand.u32 %v98, 8388607
    %v100 = vor.u32 %v99, 8388608
    %v101 = vsub.s32 0, %v100
    %v102 = vadd.s32 %v97, 1
    %vm103 = vcmp.gt.s32.totalorder %v102, 0
    %v104 = vsel %vm103, %v102, 0
    %v105 = vshrl.u32 %v104, 5
    %v106 = vand.u32 %v104, 31
    %v107 = vsub.s32 32, %v106
    %v108 = vshrl.u32 683565275, %v107
    %v109 = vshll.u32 683565275, %v106
    %v110 = vshrl.u32 2475754826, %v107
    %v111 = vor.u32 %v109, %v110
    %v112 = vshll.u32 2475754826, %v106
    %v113 = vshrl.u32 2131351028, %v107
    %v114 = vor.u32 %v112, %v113
    %v115 = vshll.u32 2131351028, %v106
    %v116 = vshrl.u32 2102212464, %v107
    %v117 = vor.u32 %v115, %v116
    %v118 = vshll.u32 2102212464, %v106
    %v119 = vshrl.u32 920167782, %v107
    %v120 = vor.u32 %v118, %v119
    %v121 = vshll.u32 920167782, %v106
    %v122 = vshrl.u32 1326507024, %v107
    %v123 = vor.u32 %v121, %v122
    %vm124 = vcmp.lt.s32.totalorder %v105, 1
    %vm125 = vcmp.lt.s32.totalorder %v105, 2
    %vm126 = vcmp.lt.s32.totalorder %v105, 3
    %vm127 = vcmp.lt.s32.totalorder %v105, 4
    %v128 = vsel %vm124, %v108, %v111
    %v129 = vsel %vm127, %v117, 2102212464
    %v130 = vsel %vm126, %v114, %v129
    %v131 = vsel %vm125, %v128, %v130
    %v132 = vsel %vm124, %v111, %v114
    %v133 = vsel %vm127, %v120, 920167782
    %v134 = vsel %vm126, %v117, %v133
    %v135 = vsel %vm125, %v132, %v134
    %v136 = vsel %vm124, %v114, %v117
    %v137 = vsel %vm127, %v123, 1326507024
    %v138 = vsel %vm126, %v120, %v137
    %v139 = vsel %vm125, %v136, %v138
    %v140 = vshll.u32 %v100, 8
    %v141 = vmul.u32.u64.compose %v140, %v139
    %v142 = vextract.low.u32 %v141
    %v143 = vextract.high.u32 %v141
    %v144 = vmul.u32.u64.compose %v140, %v135
    %v145 = vextract.low.u32 %v144
    %v146 = vextract.high.u32 %v144
    %v147 = vmul.u32 %v140, %v131
    %v148 = vadd.s32 %v143, %v145
    %vm149 = vc.u32 %v143, %v145
    %v150 = vadd.s32 %v146, 1
    %v151 = vsel %vm149, %v150, %v146
    %v152 = vadd.s32 %v147, %v151
    %v153 = vadd.s32 %v152, 536870912
    %v154 = vshrl.u32 %v153, 30
    %v155 = vshll.u32 %v154, 30
    %v156 = vsub.s32 %v152, %v155
    %vm157 = vcmp.lt.s32.totalorder %v156, 0
    %v158 = vsub.s32 0, %v156
    %v159 = vsel %vm157, %v158, %v156
    %v160 = vclz %v159
    %v161 = vsub.s32 %v160, 2
    %vm162 = vcmp.gt.s32.totalorder 0, %v161
    %v163 = vsel %vm162, 0, %v161
    %v164 = vsub.s32 32, %v163
    %v165 = vshll.u32 %v156, %v163
    %v166 = vshrl.u32 %v148, %v164
    %v167 = vor.u32 %v165, %v166
    %v168 = vsub.s32 4294967266, %v163
    %v169 = vadd.s32 %v168, 127
    %v170 = vshll.u32 %v169, 23
    %v171 = vor.u32 4788187, %v170
    %v172 = vand.u32 2147483647, %v171
    %v174 = vcvt.s32.f32 %v167
    %v175 = vmul.f32 %v174, %v172
    %v176 = vxor.u32 %v175, 2147483648
    %v177 = vsel %vm94, %v176, %v175
    %v178 = vsub.s32 4, %v154
    %v179 = vsel %vm94, %v178, %v154
    %v180 = vsel %vm93, %v91, %v177
    %v181 = vsel %vm93, 0, %v179
    %v182 = vcosq.f32.pop %v180
    %v183 = vsinq.f32.pop %v180
    %vm184 = vweird.f32 %v91
    %v185 = vadd.s32 %v181, 3
    %v186 = vand.u32 %v185, 3
    %vm187 = vcmp.lt.s32.totalorder %v186, 2
    %vm188 = vcmp.eq.s32.totalorder %v186, 0
    %v189 = vxor.u32 %v183, 2147483648
    %v190 = vsel %vm188, %v182, %v189
    %vm191 = vcmp.eq.s32.totalorder %v186, 2
    %v192 = vxor.u32 %v182, 2147483648
    %v193 = vsel %vm191, %v192, %v183
    %v194 = vsel %vm187, %v190, %v193
    %v195 = vsel %vm184, nan, %v194
    %196 = vst [vmem:[#allocation7] sm:$0x3] %v195
    // Predicated region
    $region22: #{tpu_custom_call.1} parent=1 // pred_check
      _
    $region23: #{tpu_custom_call.1} parent=1 // pred_check_branch
      %198 = sbr.rel (0) target = $region25
    $region24: #{tpu_custom_call.1} parent=1 // pred_region
      %s200 = ssub.s32 32, 32
      %201 = vsyncadd [#allocation4], %s200
      %s203 = sshll.u32 [#allocation7], 4
      %s204 = int_to_ptr.vmem [resolvable:$true] %s203
      %206 = dma.vmem_to_hbm [thread:$0]  %s204, 32, %s3, [#allocation4]
    $region25: #{tpu_custom_call.1} parent=1 // pred_fallthru
      _
    // Predicated region
    $region26: #{tpu_custom_call.1} parent=1 // pred_check
      _
    $region27: #{tpu_custom_call.1} parent=1 // pred_check_branch
      %208 = sbr.rel (0) target = $region29
    $region28: #{tpu_custom_call.1} parent=1 // pred_region
      %209 = dma.done [#allocation4], 32
    $region29: #{tpu_custom_call.1} parent=1 // pred_fallthru
      _
    %210 = vsyncpa [#allocation3], 1
    %211 = vsyncpa [#allocation6], 1
    %212 = vsyncpa [#allocation4], 1

</llo_original>
